<compile_context>
chip_gen: v5e
topology: v5e:2x2
jax: 0.10.0
libtpu: 0.0.40
codegen_flags: <defaults>
</compile_context>

<pallas_src>
import jax
import jax.numpy as jnp
from jax.experimental import pallas as pl
from jax.experimental.pallas import tpu as pltpu


def mlp_steer_kernel(x_ref,
                     w1_ref, b1_ref,
                     w2_ref, b2_ref,
                     w3_ref, b3_ref,
                     w4_ref, b4_ref,
                     o_ref):
    # Weights may be f32 or bf16; activations / biases are f32.  Only the dot
    # operands get cast to the weight dtype; accumulation is always f32.
    wdt = w1_ref.dtype

    x = x_ref[...].astype(wdt)

    h = jnp.dot(x, w1_ref[...], preferred_element_type=jnp.float32) + b1_ref[...]
    h = jnp.maximum(h, 0.0)

    h = jnp.dot(h.astype(wdt), w2_ref[...], preferred_element_type=jnp.float32) + b2_ref[...]
    h = jnp.maximum(h, 0.0)

    h = jnp.dot(h.astype(wdt), w3_ref[...], preferred_element_type=jnp.float32) + b3_ref[...]
    h = jnp.maximum(h, 0.0)

    h = jnp.dot(h.astype(wdt), w4_ref[...], preferred_element_type=jnp.float32) + b4_ref[...]
    o_ref[...] = jnp.tanh(h).astype(o_ref.dtype)


def prepare_params(params, compute_dtype=jnp.float32):
    """One-time model-load transform of PyTorch-layout params.

    params: dict with w1..w4 of shape (out, in) and b1..b4 of shape (out,).
    Returns a dict holding the kernel operands:
      - weights transposed to (in, out), cast to compute_dtype,
      - biases reshaped to (1, out), kept in f32,
      - last layer zero-padded on the output axis to a multiple of 128 lanes.
    """
    out = {}
    args = []
    for i in (1, 2, 3, 4):
        w = jnp.asarray(params[f"w{i}"], jnp.float32).T          # (in, out)
        b = jnp.asarray(params[f"b{i}"], jnp.float32).reshape(1, -1)
        if i == 4:
            num_output = w.shape[1]
            out_pad = 128 * ((num_output + 127) // 128)          # lane-dense store
            if out_pad != num_output:
                w = jnp.pad(w, ((0, 0), (0, out_pad - num_output)))
                b = jnp.pad(b, ((0, 0), (0, out_pad - num_output)))
            out["num_output"] = num_output
            out["out_pad"] = out_pad
        args.append(w.astype(compute_dtype))
        args.append(b)                                            # biases stay f32
    out["args"] = tuple(args)
    out["num_features"] = args[0].shape[0]
    return out


def torcs_mlp_nn_steer(x, prepared, *, block_batch=512):
    """Forward pass.  x: (batch, num_features) f32.  Returns (batch, num_output) f32."""
    batch = x.shape[0]
    args = prepared["args"]
    num_output = prepared["num_output"]
    out_pad = prepared["out_pad"]

    # Batch tile: whole batch if small, else 512-row tiles (8-sublane aligned).
    if batch <= block_batch:
        tb = batch
        grid = (1,)
    else:
        tb = block_batch
        grid = (pl.cdiv(batch, tb),)

    # x / out walk the batch axis; weights & biases stay resident (block 0,0).
    x_spec = pl.BlockSpec((tb, x.shape[1]), lambda i: (i, 0))
    resident = lambda a: pl.BlockSpec(a.shape, lambda i: (0, 0))
    in_specs = [x_spec] + [resident(a) for a in args]
    out_spec = pl.BlockSpec((tb, out_pad), lambda i: (i, 0))

    out_padded = pl.pallas_call(
        mlp_steer_kernel,
        out_shape=jax.ShapeDtypeStruct((batch, out_pad), jnp.float32),
        grid=grid,
        in_specs=in_specs,
        out_specs=out_spec,
        compiler_params=pltpu.CompilerParams(
            dimension_semantics=("parallel",)),
    )(x, *args)

    return out_padded[:, :num_output]


def _init_linear(key, fan_in, fan_out):
    """Deterministic init mimicking PyTorch's default uniform(-1/sqrt(in), 1/sqrt(in))."""
    kw, kb = jax.random.split(key)
    bound = 1.0 / jnp.sqrt(jnp.float32(fan_in))
    w = jax.random.uniform(kw, (fan_out, fan_in), jnp.float32, -bound, bound)
    b = jax.random.uniform(kb, (fan_out,), jnp.float32, -bound, bound)
    return w, b


def _reference(x, params):
    y = x
    for i, act in zip((1, 2, 3, 4), (jax.nn.relu, jax.nn.relu, jax.nn.relu, jnp.tanh)):
        y = act(y @ params[f"w{i}"].T + params[f"b{i}"])
    return y


if __name__ == "__main__":
    num_features = 32
    num_nodes_hidden = 32
    num_output = 1

    root = jax.random.PRNGKey(0)
    kx, kx2, k1, k2, k3, k4 = jax.random.split(root, 6)

    params = {}
    params["w1"], params["b1"] = _init_linear(k1, num_features, num_nodes_hidden)
    params["w2"], params["b2"] = _init_linear(k2, num_nodes_hidden, num_nodes_hidden)
    params["w3"], params["b3"] = _init_linear(k3, num_nodes_hidden, num_nodes_hidden)
    params["w4"], params["b4"] = _init_linear(k4, num_nodes_hidden, num_output)

    # --- small batch, f32 weights: tight correctness check ------------------
    batch = 8
    x = jax.random.normal(kx, (batch, num_features), jnp.float32)
    prepared_f32 = prepare_params(params, compute_dtype=jnp.float32)
    out = jax.block_until_ready(torcs_mlp_nn_steer(x, prepared_f32))
    ref = _reference(x, params)
    assert out.shape == (batch, num_output)
    assert jnp.allclose(out, ref, atol=1e-5, rtol=1e-5)

    # --- large batch, bf16 matmul operands: exercises grid + parallel axis --
    big_batch = 1024
    x_big = jax.random.normal(kx2, (big_batch, num_features), jnp.float32)
    prepared_bf16 = prepare_params(params, compute_dtype=jnp.bfloat16)
    out_big = jax.block_until_ready(torcs_mlp_nn_steer(x_big, prepared_bf16))
    ref_big = _reference(x_big, params)
    assert out_big.shape == (big_batch, num_output)
    assert jnp.allclose(out_big, ref_big, atol=5e-2, rtol=5e-2)

    print("KERNEL_OK")
</pallas_src>

<mosaic_0001>
module attributes {stable_mosaic.version = 11 : i64} {
  func.func @mlp_steer_kernel(%arg0: i32, %arg1: memref<8x32xf32, #tpu.memory_space<vmem>>, %arg2: memref<32x32xf32, #tpu.memory_space<vmem>>, %arg3: memref<1x32xf32, #tpu.memory_space<vmem>>, %arg4: memref<32x32xf32, #tpu.memory_space<vmem>>, %arg5: memref<1x32xf32, #tpu.memory_space<vmem>>, %arg6: memref<32x32xf32, #tpu.memory_space<vmem>>, %arg7: memref<1x32xf32, #tpu.memory_space<vmem>>, %arg8: memref<32x128xf32, #tpu.memory_space<vmem>>, %arg9: memref<1x128xf32, #tpu.memory_space<vmem>>, %arg10: memref<8x128xf32, #tpu.memory_space<vmem>>) attributes {dimension_semantics = [#tpu.dimension_semantics<parallel>], iteration_bounds = array<i64: 1>, scalar_prefetch = 0 : i64, scratch_operands = 0 : i64, tpu.core_type = #tpu.core_type<tc>, window_params = [{transform_indices = @transform_0, window_bounds = array<i64: 8, 32>}, {pipeline_mode = #tpu.pipeline_mode<synchronous>, transform_indices = @transform_1, window_bounds = array<i64: 32, 32>}, {pipeline_mode = #tpu.pipeline_mode<synchronous>, transform_indices = @transform_2, window_bounds = array<i64: 1, 32>}, {pipeline_mode = #tpu.pipeline_mode<synchronous>, transform_indices = @transform_3, window_bounds = array<i64: 32, 32>}, {pipeline_mode = #tpu.pipeline_mode<synchronous>, transform_indices = @transform_4, window_bounds = array<i64: 1, 32>}, {pipeline_mode = #tpu.pipeline_mode<synchronous>, transform_indices = @transform_5, window_bounds = array<i64: 32, 32>}, {pipeline_mode = #tpu.pipeline_mode<synchronous>, transform_indices = @transform_6, window_bounds = array<i64: 1, 32>}, {pipeline_mode = #tpu.pipeline_mode<synchronous>, transform_indices = @transform_7, window_bounds = array<i64: 32, 128>}, {pipeline_mode = #tpu.pipeline_mode<synchronous>, transform_indices = @transform_8, window_bounds = array<i64: 1, 128>}, {transform_indices = @transform_9, window_bounds = array<i64: 8, 128>}]} {
    %c0 = arith.constant 0 : index
    %c0_0 = arith.constant 0 : index
    %0 = vector.load %arg1[%c0, %c0_0] : memref<8x32xf32, #tpu.memory_space<vmem>>, vector<8x32xf32>
    %c0_1 = arith.constant 0 : index
    %c0_2 = arith.constant 0 : index
    %1 = vector.load %arg2[%c0_1, %c0_2] : memref<32x32xf32, #tpu.memory_space<vmem>>, vector<32x32xf32>
    %cst = arith.constant dense<0.000000e+00> : vector<8x32xf32>
    %2 = tpu.matmul %0, %1, %cst {dimension_numbers = #tpu.dot_dimension_numbers<[1], [0], [0], [1], [0, 0, 1, 1], [], []>} : vector<8x32xf32>, vector<32x32xf32>, vector<8x32xf32> -> vector<8x32xf32>
    %c0_3 = arith.constant 0 : index
    %c0_4 = arith.constant 0 : index
    %3 = vector.load %arg3[%c0_3, %c0_4] : memref<1x32xf32, #tpu.memory_space<vmem>>, vector<1x32xf32>
    %4 = vector.broadcast %3 : vector<1x32xf32> to vector<8x32xf32>
    %5 = arith.addf %2, %4 : vector<8x32xf32>
    %cst_5 = arith.constant 0.000000e+00 : f32
    %6 = vector.broadcast %cst_5 : f32 to vector<8x32xf32>
    %7 = arith.maximumf %5, %6 : vector<8x32xf32>
    %c0_6 = arith.constant 0 : index
    %c0_7 = arith.constant 0 : index
    %8 = vector.load %arg4[%c0_6, %c0_7] : memref<32x32xf32, #tpu.memory_space<vmem>>, vector<32x32xf32>
    %cst_8 = arith.constant dense<0.000000e+00> : vector<8x32xf32>
    %9 = tpu.matmul %7, %8, %cst_8 {dimension_numbers = #tpu.dot_dimension_numbers<[1], [0], [0], [1], [0, 0, 1, 1], [], []>} : vector<8x32xf32>, vector<32x32xf32>, vector<8x32xf32> -> vector<8x32xf32>
    %c0_9 = arith.constant 0 : index
    %c0_10 = arith.constant 0 : index
    %10 = vector.load %arg5[%c0_9, %c0_10] : memref<1x32xf32, #tpu.memory_space<vmem>>, vector<1x32xf32>
    %11 = vector.broadcast %10 : vector<1x32xf32> to vector<8x32xf32>
    %12 = arith.addf %9, %11 : vector<8x32xf32>
    %cst_11 = arith.constant 0.000000e+00 : f32
    %13 = vector.broadcast %cst_11 : f32 to vector<8x32xf32>
    %14 = arith.maximumf %12, %13 : vector<8x32xf32>
    %c0_12 = arith.constant 0 : index
    %c0_13 = arith.constant 0 : index
    %15 = vector.load %arg6[%c0_12, %c0_13] : memref<32x32xf32, #tpu.memory_space<vmem>>, vector<32x32xf32>
    %cst_14 = arith.constant dense<0.000000e+00> : vector<8x32xf32>
    %16 = tpu.matmul %14, %15, %cst_14 {dimension_numbers = #tpu.dot_dimension_numbers<[1], [0], [0], [1], [0, 0, 1, 1], [], []>} : vector<8x32xf32>, vector<32x32xf32>, vector<8x32xf32> -> vector<8x32xf32>
    %c0_15 = arith.constant 0 : index
    %c0_16 = arith.constant 0 : index
    %17 = vector.load %arg7[%c0_15, %c0_16] : memref<1x32xf32, #tpu.memory_space<vmem>>, vector<1x32xf32>
    %18 = vector.broadcast %17 : vector<1x32xf32> to vector<8x32xf32>
    %19 = arith.addf %16, %18 : vector<8x32xf32>
    %cst_17 = arith.constant 0.000000e+00 : f32
    %20 = vector.broadcast %cst_17 : f32 to vector<8x32xf32>
    %21 = arith.maximumf %19, %20 : vector<8x32xf32>
    %c0_18 = arith.constant 0 : index
    %c0_19 = arith.constant 0 : index
    %22 = vector.load %arg8[%c0_18, %c0_19] : memref<32x128xf32, #tpu.memory_space<vmem>>, vector<32x128xf32>
    %cst_20 = arith.constant dense<0.000000e+00> : vector<8x128xf32>
    %23 = tpu.matmul %21, %22, %cst_20 {dimension_numbers = #tpu.dot_dimension_numbers<[1], [0], [0], [1], [0, 0, 1, 1], [], []>} : vector<8x32xf32>, vector<32x128xf32>, vector<8x128xf32> -> vector<8x128xf32>
    %c0_21 = arith.constant 0 : index
    %c0_22 = arith.constant 0 : index
    %24 = vector.load %arg9[%c0_21, %c0_22] : memref<1x128xf32, #tpu.memory_space<vmem>>, vector<1x128xf32>
    %25 = vector.broadcast %24 : vector<1x128xf32> to vector<8x128xf32>
    %26 = arith.addf %23, %25 : vector<8x128xf32>
    %27 = math.tanh %26 : vector<8x128xf32>
    %c0_23 = arith.constant 0 : index
    %c0_24 = arith.constant 0 : index
    %28 = vector.load %arg10[%c0_23, %c0_24] : memref<8x128xf32, #tpu.memory_space<vmem>>, vector<8x128xf32>
    tpu.vector_store %arg10[%c0_23, %c0_24], %27 {strides = array<i32>} : memref<8x128xf32, #tpu.memory_space<vmem>>, vector<8x128xf32>,
    return
  }
  func.func @transform_0(%arg0: i32) -> (i32, i32) {
    %c0_i32 = arith.constant 0 : i32
    %c0_i32_0 = arith.constant 0 : i32
    return %arg0, %c0_i32 : i32, i32
  }
  func.func @transform_1(%arg0: i32) -> (i32, i32) {
    %c0_i32 = arith.constant 0 : i32
    %c0_i32_0 = arith.constant 0 : i32
    %c0_i32_1 = arith.constant 0 : i32
    return %c0_i32, %c0_i32_0 : i32, i32
  }
  func.func @transform_2(%arg0: i32) -> (i32, i32) {
    %c0_i32 = arith.constant 0 : i32
    %c0_i32_0 = arith.constant 0 : i32
    %c0_i32_1 = arith.constant 0 : i32
    return %c0_i32, %c0_i32_0 : i32, i32
  }
  func.func @transform_3(%arg0: i32) -> (i32, i32) {
    %c0_i32 = arith.constant 0 : i32
    %c0_i32_0 = arith.constant 0 : i32
    %c0_i32_1 = arith.constant 0 : i32
    return %c0_i32, %c0_i32_0 : i32, i32
  }
  func.func @transform_4(%arg0: i32) -> (i32, i32) {
    %c0_i32 = arith.constant 0 : i32
    %c0_i32_0 = arith.constant 0 : i32
    %c0_i32_1 = arith.constant 0 : i32
    return %c0_i32, %c0_i32_0 : i32, i32
  }
  func.func @transform_5(%arg0: i32) -> (i32, i32) {
    %c0_i32 = arith.constant 0 : i32
    %c0_i32_0 = arith.constant 0 : i32
    %c0_i32_1 = arith.constant 0 : i32
    return %c0_i32, %c0_i32_0 : i32, i32
  }
  func.func @transform_6(%arg0: i32) -> (i32, i32) {
    %c0_i32 = arith.constant 0 : i32
    %c0_i32_0 = arith.constant 0 : i32
    %c0_i32_1 = arith.constant 0 : i32
    return %c0_i32, %c0_i32_0 : i32, i32
  }
  func.func @transform_7(%arg0: i32) -> (i32, i32) {
    %c0_i32 = arith.constant 0 : i32
    %c0_i32_0 = arith.constant 0 : i32
    %c0_i32_1 = arith.constant 0 : i32
    return %c0_i32, %c0_i32_0 : i32, i32
  }
  func.func @transform_8(%arg0: i32) -> (i32, i32) {
    %c0_i32 = arith.constant 0 : i32
    %c0_i32_0 = arith.constant 0 : i32
    %c0_i32_1 = arith.constant 0 : i32
    return %c0_i32, %c0_i32_0 : i32, i32
  }
  func.func @transform_9(%arg0: i32) -> (i32, i32) {
    %c0_i32 = arith.constant 0 : i32
    %c0_i32_0 = arith.constant 0 : i32
    return %arg0, %c0_i32 : i32, i32
  }
}

</mosaic_0001>

<llo_original>
// kernel: tpu_custom_call.1
$region0: #{tpu_custom_call.1}
  #allocation0 [shape = 'u32[]', space=smem, size = 0x4, offset = 0x4, fixed_abs, tag = 'smem constant byte address 0x4 - core index']
  #allocation1 [shape = 'u32[72,128]{1,0:T(1,128)}', space=vmem, size = 0x9000, scoped, tag = 'internal scratch']
  %s0 = inlined_call_operand.hbm [shape: f32[8,32], index: 0, kind: input, shape index: {}]
  %s1 = inlined_call_operand.hbm [shape: f32[32,32], index: 1, kind: input, shape index: {}]
  %s2 = inlined_call_operand.vmem [shape: f32[1,32], index: 2, kind: input, shape index: {}]
  %s3 = inlined_call_operand.hbm [shape: f32[32,32], index: 3, kind: input, shape index: {}]
  %s4 = inlined_call_operand.vmem [shape: f32[1,32], index: 4, kind: input, shape index: {}]
  %s5 = inlined_call_operand.hbm [shape: f32[32,32], index: 5, kind: input, shape index: {}]
  %s6 = inlined_call_operand.vmem [shape: f32[1,32], index: 6, kind: input, shape index: {}]
  %s7 = inlined_call_operand.hbm [shape: f32[32,128], index: 7, kind: input, shape index: {}]
  %s8 = inlined_call_operand.vmem [shape: f32[1,128], index: 8, kind: input, shape index: {}]
  %s9 = inlined_call_operand.hbm [shape: f32[8,128], index: 9, kind: output, shape index: {}]
  %s10 = sld [smem:[#allocation0]]
  $region66: #{tpu_custom_call.1} parent=0
    _
  %s12 = ssub.s32 1, %s10
  %s13 = scalar_select 0, %s12, %s10
  $region1: #{tpu_custom_call.1} parent=0
    #allocation2 [shape = 'u8[4096]{0}', space=vmem, size = 0x1000, scoped, tag = 'input window, operand 0, single buffered']
    #allocation3 [shape = 's32[1]{0}', space=sflag, size = 0x4, scoped, tag = 'scoped memory for tpu_custom_call.1']
    #allocation4 [shape = 's32[1]{0}', space=sflag, size = 0x4, scoped, tag = 'scoped memory for tpu_custom_call.1']
    #allocation5 [shape = 'u8[16384]{0}', space=vmem, size = 0x4000, scoped, tag = 'input window, operand 1, single buffered']
    #allocation6 [shape = 's32[1]{0}', space=sflag, size = 0x4, scoped, tag = 'scoped memory for tpu_custom_call.1']
    #allocation7 [shape = 'u8[16384]{0}', space=vmem, size = 0x4000, scoped, tag = 'input window, operand 3, single buffered']
    #allocation8 [shape = 'u8[16384]{0}', space=vmem, size = 0x4000, scoped, tag = 'input window, operand 5, single buffered']
    #allocation9 [shape = 's32[1]{0}', space=sflag, size = 0x4, scoped, tag = 'scoped memory for tpu_custom_call.1']
    #allocation10 [shape = 'u8[16384]{0}', space=vmem, size = 0x4000, scoped, tag = 'input window, operand 7, single buffered']
    #allocation11 [shape = 'u8[4096]{0}', space=vmem, size = 0x1000, scoped, tag = 'output window, operand 0, single buffered']
    %14 = vsyncpa [#allocation3], 0
    %15 = vsyncpa [#allocation6], 0
    %16 = vsyncpa [#allocation9], 0
    %17 = vsyncpa [#allocation4], 0
    // Predicated region
    $region2: #{tpu_custom_call.1} parent=1 // pred_check
      _
    $region3: #{tpu_custom_call.1} parent=1 // pred_check_branch
      %19 = sbr.rel (0) target = $region5
    $region4: #{tpu_custom_call.1} parent=1 // pred_region
      %21 = vsyncadd [#allocation3], 0
      %s23 = sshll.u32 %s0, 4
      %s24 = int_to_ptr.hbm [resolvable:$true] %s23
      %s25 = sshll.u32 [#allocation2], 4
      %s26 = int_to_ptr.vmem [resolvable:$true] %s25
      %28 = dma.hbm_to_vmem [thread:$0]  %s24, 128, %s26, [#allocation3]
    $region5: #{tpu_custom_call.1} parent=1 // pred_fallthru
      _
    // Predicated region
    $region6: #{tpu_custom_call.1} parent=1 // pred_check
      _
    $region7: #{tpu_custom_call.1} parent=1 // pred_check_branch
      %30 = sbr.rel (0) target = $region9
    $region8: #{tpu_custom_call.1} parent=1 // pred_region
      %32 = vsyncadd [#allocation6], 0
      %s33 = sshll.u32 %s1, 4
      %s34 = int_to_ptr.hbm [resolvable:$true] %s33
      %s35 = sshll.u32 [#allocation5], 4
      %s36 = int_to_ptr.vmem [resolvable:$true] %s35
      %41 = dma.hbm_to_vmem [thread:$0]  %s34, 512, %s36, [#allocation6], 128, 128, 8
    $region9: #{tpu_custom_call.1} parent=1 // pred_fallthru
      _
    // Predicated region
    $region10: #{tpu_custom_call.1} parent=1 // pred_check
      _
    $region11: #{tpu_custom_call.1} parent=1 // pred_check_branch
      %43 = sbr.rel (0) target = $region13
    $region12: #{tpu_custom_call.1} parent=1 // pred_region
      _
    $region13: #{tpu_custom_call.1} parent=1 // pred_fallthru
      _
    // Predicated region
    $region14: #{tpu_custom_call.1} parent=1 // pred_check
      _
    $region15: #{tpu_custom_call.1} parent=1 // pred_check_branch
      %45 = sbr.rel (0) target = $region17
    $region16: #{tpu_custom_call.1} parent=1 // pred_region
      %47 = vsyncadd [#allocation6], 0
      %s48 = sshll.u32 %s3, 4
      %s49 = int_to_ptr.hbm [resolvable:$true] %s48
      %s50 = sshll.u32 [#allocation7], 4
      %s51 = int_to_ptr.vmem [resolvable:$true] %s50
      %56 = dma.hbm_to_vmem [thread:$0]  %s49, 512, %s51, [#allocation6], 128, 128, 8
    $region17: #{tpu_custom_call.1} parent=1 // pred_fallthru
      _
    // Predicated region
    $region18: #{tpu_custom_call.1} parent=1 // pred_check
      _
    $region19: #{tpu_custom_call.1} parent=1 // pred_check_branch
      %58 = sbr.rel (0) target = $region21
    $region20: #{tpu_custom_call.1} parent=1 // pred_region
      _
    $region21: #{tpu_custom_call.1} parent=1 // pred_fallthru
      _
    // Predicated region
    $region22: #{tpu_custom_call.1} parent=1 // pred_check
      _
    $region23: #{tpu_custom_call.1} parent=1 // pred_check_branch
      %60 = sbr.rel (0) target = $region25
    $region24: #{tpu_custom_call.1} parent=1 // pred_region
      %62 = vsyncadd [#allocation9], 0
      %s63 = sshll.u32 %s5, 4
      %s64 = int_to_ptr.hbm [resolvable:$true] %s63
      %s65 = sshll.u32 [#allocation8], 4
      %s66 = int_to_ptr.vmem [resolvable:$true] %s65
      %71 = dma.hbm_to_vmem [thread:$0]  %s64, 512, %s66, [#allocation9], 128, 128, 8
    $region25: #{tpu_custom_call.1} parent=1 // pred_fallthru
      _
    // Predicated region
    $region26: #{tpu_custom_call.1} parent=1 // pred_check
      _
    $region27: #{tpu_custom_call.1} parent=1 // pred_check_branch
      %73 = sbr.rel (0) target = $region29
    $region28: #{tpu_custom_call.1} parent=1 // pred_region
      _
    $region29: #{tpu_custom_call.1} parent=1 // pred_fallthru
      _
    // Predicated region
    $region30: #{tpu_custom_call.1} parent=1 // pred_check
      _
    $region31: #{tpu_custom_call.1} parent=1 // pred_check_branch
      %75 = sbr.rel (0) target = $region33
    $region32: #{tpu_custom_call.1} parent=1 // pred_region
      %77 = vsyncadd [#allocation9], 0
      %s78 = sshll.u32 %s7, 4
      %s79 = int_to_ptr.hbm [resolvable:$true] %s78
      %s80 = sshll.u32 [#allocation10], 4
      %s81 = int_to_ptr.vmem [resolvable:$true] %s80
      %86 = dma.hbm_to_vmem [thread:$0]  %s79, 512, %s81, [#allocation9], 128, 128, 8
    $region33: #{tpu_custom_call.1} parent=1 // pred_fallthru
      _
    // Predicated region
    $region34: #{tpu_custom_call.1} parent=1 // pred_check
      _
    $region35: #{tpu_custom_call.1} parent=1 // pred_check_branch
      %88 = sbr.rel (0) target = $region37
    $region36: #{tpu_custom_call.1} parent=1 // pred_region
      _
    $region37: #{tpu_custom_call.1} parent=1 // pred_fallthru
      _
    // Predicated region
    $region38: #{tpu_custom_call.1} parent=1 // pred_check
      _
    $region39: #{tpu_custom_call.1} parent=1 // pred_check_branch
      %90 = sbr.rel (0) target = $region41
    $region40: #{tpu_custom_call.1} parent=1 // pred_region
      %92 = dma.done [#allocation3], 128
    $region41: #{tpu_custom_call.1} parent=1 // pred_fallthru
      _
    // Predicated region
    $region42: #{tpu_custom_call.1} parent=1 // pred_check
      _
    $region43: #{tpu_custom_call.1} parent=1 // pred_check_branch
      %94 = sbr.rel (0) target = $region45
    $region44: #{tpu_custom_call.1} parent=1 // pred_region
      %96 = dma.done [#allocation6], 512
    $region45: #{tpu_custom_call.1} parent=1 // pred_fallthru
      _
    // Predicated region
    $region46: #{tpu_custom_call.1} parent=1 // pred_check
      _
    $region47: #{tpu_custom_call.1} parent=1 // pred_check_branch
      %98 = sbr.rel (0) target = $region49
    $region48: #{tpu_custom_call.1} parent=1 // pred_region
      %100 = dma.done [#allocation6], 512
    $region49: #{tpu_custom_call.1} parent=1 // pred_fallthru
      _
    // Predicated region
    $region50: #{tpu_custom_call.1} parent=1 // pred_check
      _
    $region51: #{tpu_custom_call.1} parent=1 // pred_check_branch
      %102 = sbr.rel (0) target = $region53
    $region52: #{tpu_custom_call.1} parent=1 // pred_region
      %104 = dma.done [#allocation9], 512
    $region53: #{tpu_custom_call.1} parent=1 // pred_fallthru
      _
    // Predicated region
    $region54: #{tpu_custom_call.1} parent=1 // pred_check
      _
    $region55: #{tpu_custom_call.1} parent=1 // pred_check_branch
      %106 = sbr.rel (0) target = $region57
    $region56: #{tpu_custom_call.1} parent=1 // pred_region
      %108 = dma.done [#allocation9], 512
    $region57: #{tpu_custom_call.1} parent=1 // pred_fallthru
      _
    %v109 = vld [vmem:[#allocation2] sm:$0xff]
    %v110 = vld [vmem:[#allocation5] sm:$0xff]
    %v111 = vld [vmem:[#allocation5 + $0x8] sm:$0xff]
    %v112 = vld [vmem:[#allocation5 + $0x10] sm:$0xff]
    %v113 = vld [vmem:[#allocation5 + $0x18] sm:$0xff]
    %v114 = vld [vmem:[%s2] sm:$0x1]
    %v116 = vperm.slane %v114, 0
    %vm118 = vcmask 261120
    %v120 = vsel %vm118, %v109, 0
    %122 = vmatpush.msra.mxu0 0.0
    %123 = vmatpush.msra.mxu0 0.0
    %124 = vmatpush.msra.mxu0 0.0
    %125 = vmatpush.msra.mxu0 0.0
    %126 = vmatpush.msra.mxu0 0.0
    %127 = vmatpush.msra.mxu0 0.0
    %128 = vmatpush.msra.mxu0 0.0
    %129 = vmatpush.msra.mxu0 0.0
    %130 = vmatpush.msra.mxu0 0.0
    %131 = vmatpush.msra.mxu0 0.0
    %132 = vmatpush.msra.mxu0 0.0
    %133 = vmatpush.msra.mxu0 0.0
    %134 = vmatpush.msra.mxu0 %v113
    %135 = vmatpush.msra.mxu0 %v112
    %136 = vmatpush.msra.mxu0 %v111
    %137 = vmatpush.msra.mxu0 %v110
    %138 = vmatmul.f32.gmra.mxu0 %v120
    %v139 = vpop.f32.mrf.mxu0
    %v140 = vadd.f32 %v116, %v139
    %141 = vdwg.mxu0
    %v142 = vmax.f32 %v140, 0.0
    %v143 = vld [vmem:[#allocation7] sm:$0xff]
    %v144 = vld [vmem:[#allocation7 + $0x8] sm:$0xff]
    %v145 = vld [vmem:[#allocation7 + $0x10] sm:$0xff]
    %v146 = vld [vmem:[#allocation7 + $0x18] sm:$0xff]
    %v147 = vld [vmem:[%s4] sm:$0x1]
    %v149 = vperm.slane %v147, 0
    %v152 = vsel %vm118, %v142, 0
    %154 = vmatpush.msra.mxu0 0.0
    %155 = vmatpush.msra.mxu0 0.0
    %156 = vmatpush.msra.mxu0 0.0
    %157 = vmatpush.msra.mxu0 0.0
    %158 = vmatpush.msra.mxu0 0.0
    %159 = vmatpush.msra.mxu0 0.0
    %160 = vmatpush.msra.mxu0 0.0
    %161 = vmatpush.msra.mxu0 0.0
    %162 = vmatpush.msra.mxu0 0.0
    %163 = vmatpush.msra.mxu0 0.0
    %164 = vmatpush.msra.mxu0 0.0
    %165 = vmatpush.msra.mxu0 0.0
    %166 = vmatpush.msra.mxu0 %v146
    %167 = vmatpush.msra.mxu0 %v145
    %168 = vmatpush.msra.mxu0 %v144
    %169 = vmatpush.msra.mxu0 %v143
    %170 = vmatmul.f32.gmra.mxu0 %v152
    %v171 = vpop.f32.mrf.mxu0
    %v172 = vadd.f32 %v149, %v171
    %173 = vdwg.mxu0
    %v174 = vmax.f32 %v172, 0.0
    %v175 = vld [vmem:[#allocation8] sm:$0xff]
    %v176 = vld [vmem:[#allocation8 + $0x8] sm:$0xff]
    %v177 = vld [vmem:[#allocation8 + $0x10] sm:$0xff]
    %v178 = vld [vmem:[#allocation8 + $0x18] sm:$0xff]
    %v179 = vld [vmem:[%s6] sm:$0x1]
    %v181 = vperm.slane %v179, 0
    %v184 = vsel %vm118, %v174, 0
    %186 = vmatpush.msra.mxu0 0.0
    %187 = vmatpush.msra.mxu0 0.0
    %188 = vmatpush.msra.mxu0 0.0
    %189 = vmatpush.msra.mxu0 0.0
    %190 = vmatpush.msra.mxu0 0.0
    %191 = vmatpush.msra.mxu0 0.0
    %192 = vmatpush.msra.mxu0 0.0
    %193 = vmatpush.msra.mxu0 0.0
    %194 = vmatpush.msra.mxu0 0.0
    %195 = vmatpush.msra.mxu0 0.0
    %196 = vmatpush.msra.mxu0 0.0
    %197 = vmatpush.msra.mxu0 0.0
    %198 = vmatpush.msra.mxu0 %v178
    %199 = vmatpush.msra.mxu0 %v177
    %200 = vmatpush.msra.mxu0 %v176
    %201 = vmatpush.msra.mxu0 %v175
    %202 = vmatmul.f32.gmra.mxu0 %v184
    %v203 = vpop.f32.mrf.mxu0
    %v204 = vadd.f32 %v181, %v203
    %205 = vdwg.mxu0
    %v206 = vmax.f32 %v204, 0.0
    %v207 = vld [vmem:[#allocation10] sm:$0xff]
    %v208 = vld [vmem:[#allocation10 + $0x8] sm:$0xff]
    %v209 = vld [vmem:[#allocation10 + $0x10] sm:$0xff]
    %v210 = vld [vmem:[#allocation10 + $0x18] sm:$0xff]
    %v211 = vld [vmem:[%s8] sm:$0x1]
    %v213 = vperm.slane %v211, 0
    %v216 = vsel %vm118, %v206, 0
    %218 = vmatpush.msra.mxu0 0.0
    %219 = vmatpush.msra.mxu0 0.0
    %220 = vmatpush.msra.mxu0 0.0
    %221 = vmatpush.msra.mxu0 0.0
    %222 = vmatpush.msra.mxu0 0.0
    %223 = vmatpush.msra.mxu0 0.0
    %224 = vmatpush.msra.mxu0 0.0
    %225 = vmatpush.msra.mxu0 0.0
    %226 = vmatpush.msra.mxu0 0.0
    %227 = vmatpush.msra.mxu0 0.0
    %228 = vmatpush.msra.mxu0 0.0
    %229 = vmatpush.msra.mxu0 0.0
    %230 = vmatpush.msra.mxu0 %v210
    %231 = vmatpush.msra.mxu0 %v209
    %232 = vmatpush.msra.mxu0 %v208
    %233 = vmatpush.msra.mxu0 %v207
    %234 = vmatmul.f32.gmra.mxu0 %v216
    %v235 = vpop.f32.mrf.mxu0
    %v236 = vadd.f32 %v213, %v235
    %237 = vdwg.mxu0
    %v238 = vtanh.pop %v236
    %239 = vst [vmem:[#allocation11] sm:$0xff] %v238
    // Predicated region
    $region58: #{tpu_custom_call.1} parent=1 // pred_check
      _
    $region59: #{tpu_custom_call.1} parent=1 // pred_check_branch
      %241 = sbr.rel (0) target = $region61
    $region60: #{tpu_custom_call.1} parent=1 // pred_region
      %243 = vsyncadd [#allocation4], 0
      %s245 = sshll.u32 [#allocation11], 4
      %s246 = int_to_ptr.vmem [resolvable:$true] %s245
      %s247 = sshll.u32 %s9, 4
      %s248 = int_to_ptr.hbm [resolvable:$true] %s247
      %250 = dma.vmem_to_hbm [thread:$0]  %s246, 128, %s248, [#allocation4]
    $region61: #{tpu_custom_call.1} parent=1 // pred_fallthru
      _
    // Predicated region
    $region62: #{tpu_custom_call.1} parent=1 // pred_check
      _
    $region63: #{tpu_custom_call.1} parent=1 // pred_check_branch
      %252 = sbr.rel (0) target = $region65
    $region64: #{tpu_custom_call.1} parent=1 // pred_region
      %254 = dma.done [#allocation4], 128
    $region65: #{tpu_custom_call.1} parent=1 // pred_fallthru
      _
    %255 = vsyncpa [#allocation3], 1
    %256 = vsyncpa [#allocation6], 1
    %257 = vsyncpa [#allocation9], 1
    %258 = vsyncpa [#allocation4], 1

</llo_original>
